<compile_context>
chip_gen: v5e
topology: v5e:2x2
jax: 0.10.0
libtpu: 0.0.40
codegen_flags: <defaults>
</compile_context>

<pallas_src>
import math
from functools import partial

import jax
import jax.numpy as jnp
from jax.experimental import pallas as pl
from jax.experimental.pallas import tpu as pltpu


def _lcm(a, b):
    return a * b // math.gcd(a, b)


def _sublane(dtype):
    # f32 -> 8 rows per vreg, bf16 -> 16, int8/fp8 -> 32.
    return max(8, 256 // (jnp.dtype(dtype).itemsize * 8))


def _copy_kernel(x_ref, o_ref):
    # All of the permutation was expressed at the DMA / index_map level.
    o_ref[...] = x_ref[...]


def _transpose_kernel(x_ref, o_ref, *, axes):
    # Minimal residual in-VMEM transpose of the block dims.
    o_ref[...] = jnp.transpose(x_ref[...], axes)


def pallas_permute(x, order, *, target_block_bytes=1 << 20):
    """Pallas TPU equivalent of torch.Tensor.permute(*order)."""
    order = tuple(int(d) for d in order)
    ndim = x.ndim
    assert sorted(order) == list(range(ndim)), f"bad permutation {order}"
    out_shape = tuple(x.shape[d] for d in order)

    if ndim <= 1 or order == tuple(range(ndim)):
        return x

    itemsize = jnp.dtype(x.dtype).itemsize
    sub = _sublane(x.dtype)

    # Input dims that must live inside a single block:
    #   - the input's last two dims (input lane/sublane axes), and
    #   - the dims that become the output's last two dims (so the output tile's
    #     trailing dims are full -> no (8,128) violations, dense stores).
    S = set(order[-2:]) | {ndim - 2, ndim - 1}

    # Chunk granularity of a block dim, given its position on input & output.
    def _granularity(d):
        g = 1
        for pos in (d, order.index(d)):      # input position is d itself
            if pos == ndim - 1:
                g = _lcm(g, 128)             # lane axis
            elif pos == ndim - 2:
                g = _lcm(g, sub)             # sublane axis
        return g

    chunk = {d: x.shape[d] for d in S}
    block_bytes = itemsize * math.prod(x.shape[d] for d in S)

    # Shrink the block toward the target by chunking the most flexible S dim.
    if block_bytes > target_block_bytes:
        cands = []
        for d in S:
            g = _granularity(d)
            if x.shape[d] % g == 0 and x.shape[d] >= 2 * g:
                cands.append((g, -x.shape[d], d))
        if cands:
            g, _, d = min(cands)
            per_unit = block_bytes // x.shape[d]
            c = max((max(target_block_bytes // per_unit, 1) // g) * g, g)
            c = min(c, x.shape[d])
            while x.shape[d] % c != 0:
                c -= g
            chunk[d] = c
            block_bytes = per_unit * c

    # Grid: one axis per output position that is outside S (squeezed, size-1
    # block) or a chunked S dim.  Ordered by output position so the output is
    # written roughly sequentially.
    grid = []
    axis_of_dim = {}
    for j in range(ndim):
        d = order[j]
        if d not in S:
            axis_of_dim[d] = len(grid)
            grid.append(out_shape[j])
        elif chunk[d] != x.shape[d]:
            axis_of_dim[d] = len(grid)
            grid.append(x.shape[d] // chunk[d])
    if not grid:
        grid = [1]
    grid = tuple(grid)

    def in_index_map(*idx):
        return tuple(idx[axis_of_dim[d]] if d in axis_of_dim else 0
                     for d in range(ndim))

    def out_index_map(*idx):
        return tuple(idx[axis_of_dim[order[j]]] if order[j] in axis_of_dim else 0
                     for j in range(ndim))

    in_block = tuple(chunk[d] if d in S else None for d in range(ndim))
    out_block = tuple(chunk[order[j]] if order[j] in S else None
                      for j in range(ndim))

    # Residual permutation of the (squeezed) block dims.
    in_S_order = [d for d in range(ndim) if d in S]
    out_S_order = [d for d in order if d in S]
    axes = tuple(in_S_order.index(d) for d in out_S_order)
    kernel = _copy_kernel if axes == tuple(range(len(axes))) else partial(
        _transpose_kernel, axes=axes)

    # TODO(synk): when the lane axis moves and the trailing output dims collapse
    # to a multiple of 128, present a lane-collapsed output slab (reshape
    # wrapper-side) to get unmasked full-lane stores for tiny trailing C.

    vmem_limit = int(min(max(4 * block_bytes + (2 << 20), 32 << 20), 48 << 20))

    return pl.pallas_call(
        kernel,
        out_shape=jax.ShapeDtypeStruct(out_shape, x.dtype),
        grid_spec=pltpu.PrefetchScalarGridSpec(
            num_scalar_prefetch=0,
            grid=grid,
            in_specs=[pl.BlockSpec(in_block, in_index_map)],
            out_specs=pl.BlockSpec(out_block, out_index_map),
        ),
        compiler_params=pltpu.CompilerParams(
            dimension_semantics=("parallel",) * len(grid),
            vmem_limit_bytes=vmem_limit,
        ),
        cost_estimate=pl.CostEstimate(
            flops=0, transcendentals=0, bytes_accessed=2 * x.size * itemsize),
    )(x)


if __name__ == "__main__":
    key = jax.random.PRNGKey(0)

    # Primary case: Permute(0, 2, 3, 1) on an NCHW feature map -> NHWC.
    x = jax.random.normal(key, (2, 4, 16, 16), dtype=jnp.float32)
    order = (0, 2, 3, 1)
    out = jax.block_until_ready(pallas_permute(x, order))
    ref = jnp.transpose(x, order)
    assert out.shape == ref.shape, (out.shape, ref.shape)
    assert out.dtype == ref.dtype, (out.dtype, ref.dtype)
    assert bool(jnp.array_equal(out, ref)), "mismatch vs reference (0,2,3,1)"

    # Pure-copy path: leading-axis permute handled entirely by grid/index_map.
    out2 = jax.block_until_ready(pallas_permute(x, (1, 0, 2, 3)))
    assert bool(jnp.array_equal(out2, jnp.transpose(x, (1, 0, 2, 3)))), \
        "mismatch vs reference (1,0,2,3)"

    # Chunked-tile path (small target forces H-chunking: block (C, Hc, W)).
    x3 = jax.random.normal(jax.random.PRNGKey(0), (2, 4, 32, 16),
                           dtype=jnp.float32)
    out3 = jax.block_until_ready(
        pallas_permute(x3, (0, 2, 3, 1), target_block_bytes=4096))
    assert bool(jnp.array_equal(out3, jnp.transpose(x3, (0, 2, 3, 1)))), \
        "mismatch vs reference (chunked)"

    print("KERNEL_OK")
</pallas_src>

<mosaic_0001>
module attributes {stable_mosaic.version = 11 : i64} {
  func.func @_transpose_kernel(%arg0: i32, %arg1: memref<1x4x16x16xf32, #tpu.memory_space<vmem>>, %arg2: memref<1x16x16x4xf32, #tpu.memory_space<vmem>>) attributes {dimension_semantics = [#tpu.dimension_semantics<parallel>], iteration_bounds = array<i64: 2>, scalar_prefetch = 0 : i64, scratch_operands = 0 : i64, tpu.core_type = #tpu.core_type<tc>, window_params = [{transform_indices = @transform_0, window_bounds = array<i64: 1, 4, 16, 16>}, {transform_indices = @transform_1, window_bounds = array<i64: 1, 16, 16, 4>}]} {
    %c0 = arith.constant 0 : index
    %c0_0 = arith.constant 0 : index
    %c0_1 = arith.constant 0 : index
    %c0_2 = arith.constant 0 : index
    %0 = vector.load %arg1[%c0, %c0_0, %c0_1, %c0_2] : memref<1x4x16x16xf32, #tpu.memory_space<vmem>>, vector<1x4x16x16xf32>
    %1 = vector.shape_cast %0 : vector<1x4x16x16xf32> to vector<4x16x16xf32>
    %2 = tpu.transpose %1, [1, 2, 0] : vector<4x16x16xf32> -> vector<16x16x4xf32>
    %c0_3 = arith.constant 0 : index
    %c0_4 = arith.constant 0 : index
    %c0_5 = arith.constant 0 : index
    %c0_6 = arith.constant 0 : index
    %3 = vector.load %arg2[%c0_3, %c0_4, %c0_5, %c0_6] : memref<1x16x16x4xf32, #tpu.memory_space<vmem>>, vector<1x16x16x4xf32>
    %4 = vector.shape_cast %3 : vector<1x16x16x4xf32> to vector<16x16x4xf32>
    %5 = vector.shape_cast %2 : vector<16x16x4xf32> to vector<1x16x16x4xf32>
    tpu.vector_store %arg2[%c0_3, %c0_4, %c0_5, %c0_6], %5 {strides = array<i32>} : memref<1x16x16x4xf32, #tpu.memory_space<vmem>>, vector<1x16x16x4xf32>,
    return
  }
  func.func @transform_0(%arg0: i32) -> (i32, i32, i32, i32) {
    %c0_i32 = arith.constant 0 : i32
    %c0_i32_0 = arith.constant 0 : i32
    %c0_i32_1 = arith.constant 0 : i32
    %c0_i32_2 = arith.constant 0 : i32
    return %arg0, %c0_i32, %c0_i32_0, %c0_i32_1 : i32, i32, i32, i32
  }
  func.func @transform_1(%arg0: i32) -> (i32, i32, i32, i32) {
    %c0_i32 = arith.constant 0 : i32
    %c0_i32_0 = arith.constant 0 : i32
    %c0_i32_1 = arith.constant 0 : i32
    %c0_i32_2 = arith.constant 0 : i32
    return %arg0, %c0_i32, %c0_i32_0, %c0_i32_1 : i32, i32, i32, i32
  }
}

</mosaic_0001>

<llo_original>
// kernel: tpu_custom_call.1
$region0: #{tpu_custom_call.1}
  #allocation0 [shape = 'u32[]', space=smem, size = 0x4, offset = 0x4, fixed_abs, tag = 'smem constant byte address 0x4 - core index']
  #allocation1 [shape = 'u32[72,128]{1,0:T(1,128)}', space=vmem, size = 0x9000, scoped, tag = 'internal scratch']
  %s0 = inlined_call_operand.hbm [shape: f32[2,4,16,16], index: 0, kind: input, shape index: {}]
  %s1 = inlined_call_operand.vmem [shape: f32[2,16,16,4], index: 1, kind: output, shape index: {}]
  %s2 = sld [smem:[#allocation0]]
  $region41: #{tpu_custom_call.1} parent=0
    _
  %s4 = ssub.s32 1, %s2
  %s5 = scalar_select 0, %s4, %s2
  $region1: #{tpu_custom_call.1} parent=0
    #allocation2 [shape = 'u8[65536]{0}', space=vmem, size = 0x10000, scoped, tag = 'input window, operand 0']
    #allocation3 [shape = 's32[2]{0}', space=sflag, size = 0x8, scoped, tag = 'scoped memory for tpu_custom_call.1']
    %6 = vsyncpa [#allocation3], 0
    %s7 = scalar_lea.sflag [#allocation3], 1
    %8 = vsyncpa %s7, 0
    loop: start=0, step=1, limit=4
    $region2: #{tpu_custom_call.1} parent=1 // loop_pre_header
      _
    $region3: #{tpu_custom_call.1} parent=1 // loop_header
      %s10 = sphi 0, %s14
      %p11 = scmp.ge.s32.totalorder %s10, 4
      %s20 = sphi 0, %s22
      %s23 = sphi 0, %s20
      %s24 = sphi 0, %s23
      %s40 = sphi 0, %s24
      %s46 = sphi 0, %s48
      %s49 = sphi 0, %s46
      %s50 = sphi 0, %s49
      %s66 = sphi 0, %s50
    $region4: #{tpu_custom_call.1} parent=1 // loop_header_branch
      %13 = sbr.rel (%p11) target = $region8
    $region5: #{tpu_custom_call.1} parent=1 // loop_body
      %s15 = ssub.s32 %s10, 1
      %s16 = ssub.s32 %s10, 2
      %s17 = sadd.s32 %s10, 1
      %s18 = ssub.s32 %s10, %s17
      %p19 = scmp.eq.s32.totalorder %s18, 0
      %s21 = sadd.s32 %s20, 1
      %s22 = scalar_select %p19, %s20, %s21
      %p25 = pneg %p19
      %p26 = scmp.eq.s32.totalorder %s10, 1
      %p27 = por %p25, %p26
      %p28 = scmp.ne.s32.totalorder %s20, %s23
      %p29 = scmp.eq.s32.totalorder %s10, 0
      %p30 = por %p28, %p29
      %p31 = scmp.ne.s32.totalorder %s20, %s23
      %p32 = scmp.eq.s32.totalorder %s15, 1
      %p33 = por %p31, %p32
      %p34 = scmp.ne.s32.totalorder %s23, %s24
      %p35 = scmp.eq.s32.totalorder %s15, 0
      %p36 = por %p34, %p35
      %p37 = scmp.ne.s32.totalorder %s23, %s24
      %p38 = scmp.eq.s32.totalorder %s16, 1
      %p39 = por %p37, %p38
      %p41 = scmp.ne.s32.totalorder %s24, %s40
      %p42 = scmp.eq.s32.totalorder %s16, 0
      %p43 = por %p41, %p42
      %s44 = ssub.s32 %s10, %s17
      %p45 = scmp.eq.s32.totalorder %s44, 0
      %s47 = sadd.s32 %s46, 1
      %s48 = scalar_select %p45, %s46, %s47
      %p51 = pneg %p45
      %p52 = scmp.eq.s32.totalorder %s10, 1
      %p53 = por %p51, %p52
      %p54 = scmp.ne.s32.totalorder %s46, %s49
      %p55 = scmp.eq.s32.totalorder %s10, 0
      %p56 = por %p54, %p55
      %p57 = scmp.ne.s32.totalorder %s46, %s49
      %p58 = scmp.eq.s32.totalorder %s15, 1
      %p59 = por %p57, %p58
      %p60 = scmp.ne.s32.totalorder %s49, %s50
      %p61 = scmp.eq.s32.totalorder %s15, 0
      %p62 = por %p60, %p61
      %p63 = scmp.ne.s32.totalorder %s49, %s50
      %p64 = scmp.eq.s32.totalorder %s16, 1
      %p65 = por %p63, %p64
      %p67 = scmp.ne.s32.totalorder %s50, %s66
      %p68 = scmp.eq.s32.totalorder %s16, 0
      %p69 = por %p67, %p68
      %p70 = scmp.le.s32.totalorder 1, %s10
      %p71 = scmp.lt.s32.totalorder %s10, 3
      %p72 = pnand %p70, %p71
      %p73 = pneg %p72
      // Predicated region
      $region9: #{tpu_custom_call.1} parent=5 // pred_check
        _
      $region10: #{tpu_custom_call.1} parent=5 // pred_check_branch
        %75 = sbr.rel (%p72) target = $region12
      $region11: #{tpu_custom_call.1} parent=5 // pred_region
        %s76 = ssub.s32 %s10, 1
      $region12: #{tpu_custom_call.1} parent=5 // pred_fallthru
        _
      %p77 = scmp.lt.s32.totalorder %s10, 2
      // Predicated region
      $region13: #{tpu_custom_call.1} parent=5 // pred_check
        %p78 = pneg %p77
      $region14: #{tpu_custom_call.1} parent=5 // pred_check_branch
        %80 = sbr.rel (%p78) target = $region16
      $region15: #{tpu_custom_call.1} parent=5 // pred_region
        // Predicated region
        $region17: #{tpu_custom_call.1} parent=15 // pred_check
          %p81 = pneg %p30
        $region18: #{tpu_custom_call.1} parent=15 // pred_check_branch
          %83 = sbr.rel (%p81) target = $region20
        $region19: #{tpu_custom_call.1} parent=15 // pred_region
          %s84 = sand.u32 %s20, 1
          %s85 = scalar_lea.sflag [#allocation3], %s84
          %s86 = sand.u32 %s20, 1
          %s87 = smul.addr %s86, 64
          %s88 = scalar_lea.vmem [#allocation2], %s87
          %90 = vsyncadd %s85, 0
          %s91 = smul.addr %s10, 8
          %s92 = smul.addr %s91, 8
          %s93 = scalar_lea.hbm %s0, %s92
          %s94 = sshll.u32 %s93, 4
          %s95 = int_to_ptr.hbm [resolvable:$true] %s94
          %s96 = sshll.u32 %s88, 4
          %s97 = int_to_ptr.vmem [resolvable:$true] %s96
          %102 = dma.hbm_to_vmem [thread:$0]  %s95, 1024, %s97, %s85, 128, 128, 8
        $region20: #{tpu_custom_call.1} parent=15 // pred_fallthru
          _
      $region16: #{tpu_custom_call.1} parent=5 // pred_fallthru
        _
      %p103 = scmp.le.s32.totalorder 1, %s10
      %p104 = scmp.lt.s32.totalorder %s10, 3
      %p105 = pnand %p103, %p104
      %p106 = pneg %p105
      // Predicated region
      $region21: #{tpu_custom_call.1} parent=5 // pred_check
        _
      $region22: #{tpu_custom_call.1} parent=5 // pred_check_branch
        %108 = sbr.rel (%p105) target = $region24
      $region23: #{tpu_custom_call.1} parent=5 // pred_region
        %s109 = ssub.s32 %s10, 1
        %s110 = sand.u32 %s23, 1
        %s111 = scalar_lea.sflag [#allocation3], %s110
        %s112 = sand.u32 %s23, 1
        %s113 = smul.addr %s112, 64
        %s114 = scalar_lea.vmem [#allocation2], %s113
        // Predicated region
        $region25: #{tpu_custom_call.1} parent=23 // pred_check
          %p115 = pneg %p36
        $region26: #{tpu_custom_call.1} parent=23 // pred_check_branch
          %117 = sbr.rel (%p115) target = $region28
        $region27: #{tpu_custom_call.1} parent=23 // pred_region
          %119 = dma.done %s111, 1024
        $region28: #{tpu_custom_call.1} parent=23 // pred_fallthru
          _
        %s120 = sand.u32 %s23, 1
        %s121 = scalar_lea.sflag [#allocation3], %s120
        %s122 = sand.u32 %s23, 1
        %s123 = smul.addr %s122, 64
        %s124 = scalar_lea.vmem [#allocation2], %s123
        %p125 = pneg %p36
        %p126 = pneg %p33
        %p127 = pneg %p62
        %p128 = pneg %p59
        %p129 = scmp.lt.s32.totalorder %s15, 1
        %s130 = scalar_select %p129, %s15, 1
        %s131 = smul.addr %s130, 32
        %s132 = smul.addr %s131, 8
        %s133 = scalar_lea.vmem %s1, %s132
        %p134 = scmp.lt.s32.totalorder %s15, 1
        %s135 = scalar_select %p134, %s15, 1
        %s136 = smul.addr %s135, 32
        %s137 = smul.addr %s136, 8
        %s138 = scalar_lea.vmem %s1, %s137
        %v139 = vld [vmem:[%s114] sm:$0xff]
        %v140 = vld [vmem:[%s114 + $0x8] sm:$0xff]
        %v141 = vld [vmem:[%s114 + $0x10] sm:$0xff]
        %v142 = vld [vmem:[%s114 + $0x18] sm:$0xff]
        %v143 = vld [vmem:[%s114 + $0x20] sm:$0xff]
        %v144 = vld [vmem:[%s114 + $0x28] sm:$0xff]
        %v145 = vld [vmem:[%s114 + $0x30] sm:$0xff]
        %v146 = vld [vmem:[%s114 + $0x38] sm:$0xff]
        %147 = vxpose.xlu0.b32.start [1/16] %v139, 128
        %148 = vxpose.xlu0.b32.cont [2/16] %v140, 128
        %149 = vxpose.xlu0.b32.cont [3/16] 0.0, 128
        %150 = vxpose.xlu0.b32.cont [4/16] 0.0, 128
        %151 = vxpose.xlu0.b32.cont [5/16] 0.0, 128
        %152 = vxpose.xlu0.b32.cont [6/16] 0.0, 128
        %153 = vxpose.xlu0.b32.cont [7/16] 0.0, 128
        %154 = vxpose.xlu0.b32.cont [8/16] 0.0, 128
        %155 = vxpose.xlu0.b32.cont [9/16] 0.0, 128
        %156 = vxpose.xlu0.b32.cont [10/16] 0.0, 128
        %157 = vxpose.xlu0.b32.cont [11/16] 0.0, 128
        %158 = vxpose.xlu0.b32.cont [12/16] 0.0, 128
        %159 = vxpose.xlu0.b32.cont [13/16] 0.0, 128
        %160 = vxpose.xlu0.b32.cont [14/16] 0.0, 128
        %161 = vxpose.xlu0.b32.cont [15/16] 0.0, 128
        %162 = vxpose.xlu0.b32.end [16/16] 0.0, 128
        %v163 = vpop.trf.xlu0
        %v164 = vpop.trf.xlu0
        %v165 = vpop.trf.xlu0
        %v166 = vpop.trf.xlu0
        %v167 = vpop.trf.xlu0
        %v168 = vpop.trf.xlu0
        %v169 = vpop.trf.xlu0
        %v170 = vpop.trf.xlu0
        %v171 = vpop.trf.xlu0
        %v172 = vpop.trf.xlu0
        %v173 = vpop.trf.xlu0
        %v174 = vpop.trf.xlu0
        %v175 = vpop.trf.xlu0
        %v176 = vpop.trf.xlu0
        %v177 = vpop.trf.xlu0
        %v178 = vpop.trf.xlu0
        %179 = vxpose.xlu0.b32.start [1/16] %v141, 128
        %180 = vxpose.xlu0.b32.cont [2/16] %v142, 128
        %181 = vxpose.xlu0.b32.cont [3/16] 0.0, 128
        %182 = vxpose.xlu0.b32.cont [4/16] 0.0, 128
        %183 = vxpose.xlu0.b32.cont [5/16] 0.0, 128
        %184 = vxpose.xlu0.b32.cont [6/16] 0.0, 128
        %185 = vxpose.xlu0.b32.cont [7/16] 0.0, 128
        %186 = vxpose.xlu0.b32.cont [8/16] 0.0, 128
        %187 = vxpose.xlu0.b32.cont [9/16] 0.0, 128
        %188 = vxpose.xlu0.b32.cont [10/16] 0.0, 128
        %189 = vxpose.xlu0.b32.cont [11/16] 0.0, 128
        %190 = vxpose.xlu0.b32.cont [12/16] 0.0, 128
        %191 = vxpose.xlu0.b32.cont [13/16] 0.0, 128
        %192 = vxpose.xlu0.b32.cont [14/16] 0.0, 128
        %193 = vxpose.xlu0.b32.cont [15/16] 0.0, 128
        %194 = vxpose.xlu0.b32.end [16/16] 0.0, 128
        %v195 = vpop.trf.xlu0
        %v196 = vpop.trf.xlu0
        %v197 = vpop.trf.xlu0
        %v198 = vpop.trf.xlu0
        %v199 = vpop.trf.xlu0
        %v200 = vpop.trf.xlu0
        %v201 = vpop.trf.xlu0
        %v202 = vpop.trf.xlu0
        %v203 = vpop.trf.xlu0
        %v204 = vpop.trf.xlu0
        %v205 = vpop.trf.xlu0
        %v206 = vpop.trf.xlu0
        %v207 = vpop.trf.xlu0
        %v208 = vpop.trf.xlu0
        %v209 = vpop.trf.xlu0
        %v210 = vpop.trf.xlu0
        %211 = vxpose.xlu0.b32.start [1/16] %v143, 128
        %212 = vxpose.xlu0.b32.cont [2/16] %v144, 128
        %213 = vxpose.xlu0.b32.cont [3/16] 0.0, 128
        %214 = vxpose.xlu0.b32.cont [4/16] 0.0, 128
        %215 = vxpose.xlu0.b32.cont [5/16] 0.0, 128
        %216 = vxpose.xlu0.b32.cont [6/16] 0.0, 128
        %217 = vxpose.xlu0.b32.cont [7/16] 0.0, 128
        %218 = vxpose.xlu0.b32.cont [8/16] 0.0, 128
        %219 = vxpose.xlu0.b32.cont [9/16] 0.0, 128
        %220 = vxpose.xlu0.b32.cont [10/16] 0.0, 128
        %221 = vxpose.xlu0.b32.cont [11/16] 0.0, 128
        %222 = vxpose.xlu0.b32.cont [12/16] 0.0, 128
        %223 = vxpose.xlu0.b32.cont [13/16] 0.0, 128
        %224 = vxpose.xlu0.b32.cont [14/16] 0.0, 128
        %225 = vxpose.xlu0.b32.cont [15/16] 0.0, 128
        %226 = vxpose.xlu0.b32.end [16/16] 0.0, 128
        %v227 = vpop.trf.xlu0
        %v228 = vpop.trf.xlu0
        %v229 = vpop.trf.xlu0
        %v230 = vpop.trf.xlu0
        %v231 = vpop.trf.xlu0
        %v232 = vpop.trf.xlu0
        %v233 = vpop.trf.xlu0
        %v234 = vpop.trf.xlu0
        %v235 = vpop.trf.xlu0
        %v236 = vpop.trf.xlu0
        %v237 = vpop.trf.xlu0
        %v238 = vpop.trf.xlu0
        %v239 = vpop.trf.xlu0
        %v240 = vpop.trf.xlu0
        %v241 = vpop.trf.xlu0
        %v242 = vpop.trf.xlu0
        %243 = vxpose.xlu0.b32.start [1/16] %v145, 128
        %244 = vxpose.xlu0.b32.cont [2/16] %v146, 128
        %245 = vxpose.xlu0.b32.cont [3/16] 0.0, 128
        %246 = vxpose.xlu0.b32.cont [4/16] 0.0, 128
        %247 = vxpose.xlu0.b32.cont [5/16] 0.0, 128
        %248 = vxpose.xlu0.b32.cont [6/16] 0.0, 128
        %249 = vxpose.xlu0.b32.cont [7/16] 0.0, 128
        %250 = vxpose.xlu0.b32.cont [8/16] 0.0, 128
        %251 = vxpose.xlu0.b32.cont [9/16] 0.0, 128
        %252 = vxpose.xlu0.b32.cont [10/16] 0.0, 128
        %253 = vxpose.xlu0.b32.cont [11/16] 0.0, 128
        %254 = vxpose.xlu0.b32.cont [12/16] 0.0, 128
        %255 = vxpose.xlu0.b32.cont [13/16] 0.0, 128
        %256 = vxpose.xlu0.b32.cont [14/16] 0.0, 128
        %257 = vxpose.xlu0.b32.cont [15/16] 0.0, 128
        %258 = vxpose.xlu0.b32.end [16/16] 0.0, 128
        %v259 = vpop.trf.xlu0
        %v260 = vpop.trf.xlu0
        %v261 = vpop.trf.xlu0
        %v262 = vpop.trf.xlu0
        %v263 = vpop.trf.xlu0
        %v264 = vpop.trf.xlu0
        %v265 = vpop.trf.xlu0
        %v266 = vpop.trf.xlu0
        %v267 = vpop.trf.xlu0
        %v268 = vpop.trf.xlu0
        %v269 = vpop.trf.xlu0
        %v270 = vpop.trf.xlu0
        %v271 = vpop.trf.xlu0
        %v272 = vpop.trf.xlu0
        %v273 = vpop.trf.xlu0
        %v274 = vpop.trf.xlu0
        %v275 = vrot.slane %v227, 4
        %vm276 = vcmask 1047556
        %v277 = vsel %vm276, %v275, %v163
        %v278 = vrot.slane %v163, 4
        %v279 = vsel %vm276, %v227, %v278
        %v281 = vunpack.c.l.s4 1983009808
        %v282 = vunpack.c.0.s8 %v281
        %v283 = vperm.slane %v277, %v282
        %v285 = vunpack.c.l.s4 1983009808
        %v286 = vunpack.c.0.s8 %v285
        %v287 = vperm.slane %v279, %v286
        %v288 = vrot.slane %v259, 4
        %v289 = vsel %vm276, %v288, %v195
        %v290 = vrot.slane %v195, 4
        %v291 = vsel %vm276, %v259, %v290
        %v293 = vunpack.c.l.s4 1983009808
        %v294 = vunpack.c.0.s8 %v293
        %v295 = vperm.slane %v289, %v294
        %v297 = vunpack.c.l.s4 1983009808
        %v298 = vunpack.c.0.s8 %v297
        %v299 = vperm.slane %v291, %v298
        %v300 = vrot.slane %v295, 4
        %v301 = vsel %vm276, %v300, %v283
        %v302 = vrot.slane %v283, 4
        %v303 = vsel %vm276, %v295, %v302
        %v305 = vunpack.c.l.s4 1934713408
        %v306 = vunpack.c.0.s8 %v305
        %v307 = vperm.slane %v301, %v306
        %v309 = vunpack.c.l.s4 1934713408
        %v310 = vunpack.c.0.s8 %v309
        %v311 = vperm.slane %v303, %v310
        %v312 = vrot.slane %v299, 4
        %v313 = vsel %vm276, %v312, %v287
        %v314 = vrot.slane %v287, 4
        %v315 = vsel %vm276, %v299, %v314
        %v317 = vunpack.c.l.s4 1934713408
        %v318 = vunpack.c.0.s8 %v317
        %v319 = vperm.slane %v313, %v318
        %v321 = vunpack.c.l.s4 1934713408
        %v322 = vunpack.c.0.s8 %v321
        %v323 = vperm.slane %v315, %v322
        %v324 = vrot.slane %v307, 4
        %v325 = vsel %vm276, 0.0, %v324
        %v326 = vrot.slane %v311, 4
        %v327 = vsel %vm276, 0.0, %v326
        %v328 = vrot.slane %v319, 4
        %v329 = vsel %vm276, 0.0, %v328
        %v330 = vrot.slane %v323, 4
        %v331 = vsel %vm276, 0.0, %v330
        %v332 = vrot.slane %v228, 4
        %v333 = vsel %vm276, %v332, %v164
        %v334 = vrot.slane %v164, 4
        %v335 = vsel %vm276, %v228, %v334
        %v337 = vunpack.c.l.s4 1983009808
        %v338 = vunpack.c.0.s8 %v337
        %v339 = vperm.slane %v333, %v338
        %v341 = vunpack.c.l.s4 1983009808
        %v342 = vunpack.c.0.s8 %v341
        %v343 = vperm.slane %v335, %v342
        %v344 = vrot.slane %v260, 4
        %v345 = vsel %vm276, %v344, %v196
        %v346 = vrot.slane %v196, 4
        %v347 = vsel %vm276, %v260, %v346
        %v349 = vunpack.c.l.s4 1983009808
        %v350 = vunpack.c.0.s8 %v349
        %v351 = vperm.slane %v345, %v350
        %v353 = vunpack.c.l.s4 1983009808
        %v354 = vunpack.c.0.s8 %v353
        %v355 = vperm.slane %v347, %v354
        %v356 = vrot.slane %v351, 4
        %v357 = vsel %vm276, %v356, %v339
        %v358 = vrot.slane %v339, 4
        %v359 = vsel %vm276, %v351, %v358
        %v361 = vunpack.c.l.s4 1934713408
        %v362 = vunpack.c.0.s8 %v361
        %v363 = vperm.slane %v357, %v362
        %v365 = vunpack.c.l.s4 1934713408
        %v366 = vunpack.c.0.s8 %v365
        %v367 = vperm.slane %v359, %v366
        %v368 = vrot.slane %v355, 4
        %v369 = vsel %vm276, %v368, %v343
        %v370 = vrot.slane %v343, 4
        %v371 = vsel %vm276, %v355, %v370
        %v373 = vunpack.c.l.s4 1934713408
        %v374 = vunpack.c.0.s8 %v373
        %v375 = vperm.slane %v369, %v374
        %v377 = vunpack.c.l.s4 1934713408
        %v378 = vunpack.c.0.s8 %v377
        %v379 = vperm.slane %v371, %v378
        %v380 = vrot.slane %v363, 4
        %v381 = vsel %vm276, 0.0, %v380
        %v382 = vrot.slane %v367, 4
        %v383 = vsel %vm276, 0.0, %v382
        %v384 = vrot.slane %v375, 4
        %v385 = vsel %vm276, 0.0, %v384
        %v386 = vrot.slane %v379, 4
        %v387 = vsel %vm276, 0.0, %v386
        %388 = vxpose.xlu0.b32.start [1/16] %v307, 128
        %389 = vxpose.xlu0.b32.cont [2/16] 0.0, 128
        %390 = vxpose.xlu0.b32.cont [3/16] 0.0, 128
        %391 = vxpose.xlu0.b32.cont [4/16] 0.0, 128
        %392 = vxpose.xlu0.b32.cont [5/16] 0.0, 128
        %393 = vxpose.xlu0.b32.cont [6/16] 0.0, 128
        %394 = vxpose.xlu0.b32.cont [7/16] 0.0, 128
        %395 = vxpose.xlu0.b32.cont [8/16] 0.0, 128
        %396 = vxpose.xlu0.b32.cont [9/16] 0.0, 128
        %397 = vxpose.xlu0.b32.cont [10/16] 0.0, 128
        %398 = vxpose.xlu0.b32.cont [11/16] 0.0, 128
        %399 = vxpose.xlu0.b32.cont [12/16] 0.0, 128
        %400 = vxpose.xlu0.b32.cont [13/16] 0.0, 128
        %401 = vxpose.xlu0.b32.cont [14/16] 0.0, 128
        %402 = vxpose.xlu0.b32.cont [15/16] 0.0, 128
        %403 = vxpose.xlu0.b32.end [16/16] 0.0, 128
        %v404 = vpop.trf.xlu0
        %v405 = vpop.trf.xlu0
        %v406 = vpop.trf.xlu0
        %v407 = vpop.trf.xlu0
        %v408 = vpop.trf.xlu0
        %v409 = vpop.trf.xlu0
        %v410 = vpop.trf.xlu0
        %v411 = vpop.trf.xlu0
        %v412 = vpop.trf.xlu0
        %v413 = vpop.trf.xlu0
        %v414 = vpop.trf.xlu0
        %v415 = vpop.trf.xlu0
        %v416 = vpop.trf.xlu0
        %v417 = vpop.trf.xlu0
        %v418 = vpop.trf.xlu0
        %v419 = vpop.trf.xlu0
        %420 = vxpose.xlu0.b32.start [1/16] %v325, 128
        %421 = vxpose.xlu0.b32.cont [2/16] 0.0, 128
        %422 = vxpose.xlu0.b32.cont [3/16] 0.0, 128
        %423 = vxpose.xlu0.b32.cont [4/16] 0.0, 128
        %424 = vxpose.xlu0.b32.cont [5/16] 0.0, 128
        %425 = vxpose.xlu0.b32.cont [6/16] 0.0, 128
        %426 = vxpose.xlu0.b32.cont [7/16] 0.0, 128
        %427 = vxpose.xlu0.b32.cont [8/16] 0.0, 128
        %428 = vxpose.xlu0.b32.cont [9/16] 0.0, 128
        %429 = vxpose.xlu0.b32.cont [10/16] 0.0, 128
        %430 = vxpose.xlu0.b32.cont [11/16] 0.0, 128
        %431 = vxpose.xlu0.b32.cont [12/16] 0.0, 128
        %432 = vxpose.xlu0.b32.cont [13/16] 0.0, 128
        %433 = vxpose.xlu0.b32.cont [14/16] 0.0, 128
        %434 = vxpose.xlu0.b32.cont [15/16] 0.0, 128
        %435 = vxpose.xlu0.b32.end [16/16] 0.0, 128
        %v436 = vpop.trf.xlu0
        %v437 = vpop.trf.xlu0
        %v438 = vpop.trf.xlu0
        %v439 = vpop.trf.xlu0
        %v440 = vpop.trf.xlu0
        %v441 = vpop.trf.xlu0
        %v442 = vpop.trf.xlu0
        %v443 = vpop.trf.xlu0
        %v444 = vpop.trf.xlu0
        %v445 = vpop.trf.xlu0
        %v446 = vpop.trf.xlu0
        %v447 = vpop.trf.xlu0
        %v448 = vpop.trf.xlu0
        %v449 = vpop.trf.xlu0
        %v450 = vpop.trf.xlu0
        %v451 = vpop.trf.xlu0
        %452 = vxpose.xlu0.b32.start [1/16] %v311, 128
        %453 = vxpose.xlu0.b32.cont [2/16] 0.0, 128
        %454 = vxpose.xlu0.b32.cont [3/16] 0.0, 128
        %455 = vxpose.xlu0.b32.cont [4/16] 0.0, 128
        %456 = vxpose.xlu0.b32.cont [5/16] 0.0, 128
        %457 = vxpose.xlu0.b32.cont [6/16] 0.0, 128
        %458 = vxpose.xlu0.b32.cont [7/16] 0.0, 128
        %459 = vxpose.xlu0.b32.cont [8/16] 0.0, 128
        %460 = vxpose.xlu0.b32.cont [9/16] 0.0, 128
        %461 = vxpose.xlu0.b32.cont [10/16] 0.0, 128
        %462 = vxpose.xlu0.b32.cont [11/16] 0.0, 128
        %463 = vxpose.xlu0.b32.cont [12/16] 0.0, 128
        %464 = vxpose.xlu0.b32.cont [13/16] 0.0, 128
        %465 = vxpose.xlu0.b32.cont [14/16] 0.0, 128
        %466 = vxpose.xlu0.b32.cont [15/16] 0.0, 128
        %467 = vxpose.xlu0.b32.end [16/16] 0.0, 128
        %v468 = vpop.trf.xlu0
        %v469 = vpop.trf.xlu0
        %v470 = vpop.trf.xlu0
        %v471 = vpop.trf.xlu0
        %v472 = vpop.trf.xlu0
        %v473 = vpop.trf.xlu0
        %v474 = vpop.trf.xlu0
        %v475 = vpop.trf.xlu0
        %v476 = vpop.trf.xlu0
        %v477 = vpop.trf.xlu0
        %v478 = vpop.trf.xlu0
        %v479 = vpop.trf.xlu0
        %v480 = vpop.trf.xlu0
        %v481 = vpop.trf.xlu0
        %v482 = vpop.trf.xlu0
        %v483 = vpop.trf.xlu0
        %484 = vxpose.xlu0.b32.start [1/16] %v327, 128
        %485 = vxpose.xlu0.b32.cont [2/16] 0.0, 128
        %486 = vxpose.xlu0.b32.cont [3/16] 0.0, 128
        %487 = vxpose.xlu0.b32.cont [4/16] 0.0, 128
        %488 = vxpose.xlu0.b32.cont [5/16] 0.0, 128
        %489 = vxpose.xlu0.b32.cont [6/16] 0.0, 128
        %490 = vxpose.xlu0.b32.cont [7/16] 0.0, 128
        %491 = vxpose.xlu0.b32.cont [8/16] 0.0, 128
        %492 = vxpose.xlu0.b32.cont [9/16] 0.0, 128
        %493 = vxpose.xlu0.b32.cont [10/16] 0.0, 128
        %494 = vxpose.xlu0.b32.cont [11/16] 0.0, 128
        %495 = vxpose.xlu0.b32.cont [12/16] 0.0, 128
        %496 = vxpose.xlu0.b32.cont [13/16] 0.0, 128
        %497 = vxpose.xlu0.b32.cont [14/16] 0.0, 128
        %498 = vxpose.xlu0.b32.cont [15/16] 0.0, 128
        %499 = vxpose.xlu0.b32.end [16/16] 0.0, 128
        %v500 = vpop.trf.xlu0
        %v501 = vpop.trf.xlu0
        %v502 = vpop.trf.xlu0
        %v503 = vpop.trf.xlu0
        %v504 = vpop.trf.xlu0
        %v505 = vpop.trf.xlu0
        %v506 = vpop.trf.xlu0
        %v507 = vpop.trf.xlu0
        %v508 = vpop.trf.xlu0
        %v509 = vpop.trf.xlu0
        %v510 = vpop.trf.xlu0
        %v511 = vpop.trf.xlu0
        %v512 = vpop.trf.xlu0
        %v513 = vpop.trf.xlu0
        %v514 = vpop.trf.xlu0
        %v515 = vpop.trf.xlu0
        %516 = vxpose.xlu0.b32.start [1/16] %v319, 128
        %517 = vxpose.xlu0.b32.cont [2/16] 0.0, 128
        %518 = vxpose.xlu0.b32.cont [3/16] 0.0, 128
        %519 = vxpose.xlu0.b32.cont [4/16] 0.0, 128
        %520 = vxpose.xlu0.b32.cont [5/16] 0.0, 128
        %521 = vxpose.xlu0.b32.cont [6/16] 0.0, 128
        %522 = vxpose.xlu0.b32.cont [7/16] 0.0, 128
        %523 = vxpose.xlu0.b32.cont [8/16] 0.0, 128
        %524 = vxpose.xlu0.b32.cont [9/16] 0.0, 128
        %525 = vxpose.xlu0.b32.cont [10/16] 0.0, 128
        %526 = vxpose.xlu0.b32.cont [11/16] 0.0, 128
        %527 = vxpose.xlu0.b32.cont [12/16] 0.0, 128
        %528 = vxpose.xlu0.b32.cont [13/16] 0.0, 128
        %529 = vxpose.xlu0.b32.cont [14/16] 0.0, 128
        %530 = vxpose.xlu0.b32.cont [15/16] 0.0, 128
        %531 = vxpose.xlu0.b32.end [16/16] 0.0, 128
        %v532 = vpop.trf.xlu0
        %v533 = vpop.trf.xlu0
        %v534 = vpop.trf.xlu0
        %v535 = vpop.trf.xlu0
        %v536 = vpop.trf.xlu0
        %v537 = vpop.trf.xlu0
        %v538 = vpop.trf.xlu0
        %v539 = vpop.trf.xlu0
        %v540 = vpop.trf.xlu0
        %v541 = vpop.trf.xlu0
        %v542 = vpop.trf.xlu0
        %v543 = vpop.trf.xlu0
        %v544 = vpop.trf.xlu0
        %v545 = vpop.trf.xlu0
        %v546 = vpop.trf.xlu0
        %v547 = vpop.trf.xlu0
        %548 = vxpose.xlu0.b32.start [1/16] %v329, 128
        %549 = vxpose.xlu0.b32.cont [2/16] 0.0, 128
        %550 = vxpose.xlu0.b32.cont [3/16] 0.0, 128
        %551 = vxpose.xlu0.b32.cont [4/16] 0.0, 128
        %552 = vxpose.xlu0.b32.cont [5/16] 0.0, 128
        %553 = vxpose.xlu0.b32.cont [6/16] 0.0, 128
        %554 = vxpose.xlu0.b32.cont [7/16] 0.0, 128
        %555 = vxpose.xlu0.b32.cont [8/16] 0.0, 128
        %556 = vxpose.xlu0.b32.cont [9/16] 0.0, 128
        %557 = vxpose.xlu0.b32.cont [10/16] 0.0, 128
        %558 = vxpose.xlu0.b32.cont [11/16] 0.0, 128
        %559 = vxpose.xlu0.b32.cont [12/16] 0.0, 128
        %560 = vxpose.xlu0.b32.cont [13/16] 0.0, 128
        %561 = vxpose.xlu0.b32.cont [14/16] 0.0, 128
        %562 = vxpose.xlu0.b32.cont [15/16] 0.0, 128
        %563 = vxpose.xlu0.b32.end [16/16] 0.0, 128
        %v564 = vpop.trf.xlu0
        %v565 = vpop.trf.xlu0
        %v566 = vpop.trf.xlu0
        %v567 = vpop.trf.xlu0
        %v568 = vpop.trf.xlu0
        %v569 = vpop.trf.xlu0
        %v570 = vpop.trf.xlu0
        %v571 = vpop.trf.xlu0
        %v572 = vpop.trf.xlu0
        %v573 = vpop.trf.xlu0
        %v574 = vpop.trf.xlu0
        %v575 = vpop.trf.xlu0
        %v576 = vpop.trf.xlu0
        %v577 = vpop.trf.xlu0
        %v578 = vpop.trf.xlu0
        %v579 = vpop.trf.xlu0
        %580 = vxpose.xlu0.b32.start [1/16] %v323, 128
        %581 = vxpose.xlu0.b32.cont [2/16] 0.0, 128
        %582 = vxpose.xlu0.b32.cont [3/16] 0.0, 128
        %583 = vxpose.xlu0.b32.cont [4/16] 0.0, 128
        %584 = vxpose.xlu0.b32.cont [5/16] 0.0, 128
        %585 = vxpose.xlu0.b32.cont [6/16] 0.0, 128
        %586 = vxpose.xlu0.b32.cont [7/16] 0.0, 128
        %587 = vxpose.xlu0.b32.cont [8/16] 0.0, 128
        %588 = vxpose.xlu0.b32.cont [9/16] 0.0, 128
        %589 = vxpose.xlu0.b32.cont [10/16] 0.0, 128
        %590 = vxpose.xlu0.b32.cont [11/16] 0.0, 128
        %591 = vxpose.xlu0.b32.cont [12/16] 0.0, 128
        %592 = vxpose.xlu0.b32.cont [13/16] 0.0, 128
        %593 = vxpose.xlu0.b32.cont [14/16] 0.0, 128
        %594 = vxpose.xlu0.b32.cont [15/16] 0.0, 128
        %595 = vxpose.xlu0.b32.end [16/16] 0.0, 128
        %v596 = vpop.trf.xlu0
        %v597 = vpop.trf.xlu0
        %v598 = vpop.trf.xlu0
        %v599 = vpop.trf.xlu0
        %v600 = vpop.trf.xlu0
        %v601 = vpop.trf.xlu0
        %v602 = vpop.trf.xlu0
        %v603 = vpop.trf.xlu0
        %v604 = vpop.trf.xlu0
        %v605 = vpop.trf.xlu0
        %v606 = vpop.trf.xlu0
        %v607 = vpop.trf.xlu0
        %v608 = vpop.trf.xlu0
        %v609 = vpop.trf.xlu0
        %v610 = vpop.trf.xlu0
        %v611 = vpop.trf.xlu0
        %612 = vxpose.xlu0.b32.start [1/16] %v331, 128
        %613 = vxpose.xlu0.b32.cont [2/16] 0.0, 128
        %614 = vxpose.xlu0.b32.cont [3/16] 0.0, 128
        %615 = vxpose.xlu0.b32.cont [4/16] 0.0, 128
        %616 = vxpose.xlu0.b32.cont [5/16] 0.0, 128
        %617 = vxpose.xlu0.b32.cont [6/16] 0.0, 128
        %618 = vxpose.xlu0.b32.cont [7/16] 0.0, 128
        %619 = vxpose.xlu0.b32.cont [8/16] 0.0, 128
        %620 = vxpose.xlu0.b32.cont [9/16] 0.0, 128
        %621 = vxpose.xlu0.b32.cont [10/16] 0.0, 128
        %622 = vxpose.xlu0.b32.cont [11/16] 0.0, 128
        %623 = vxpose.xlu0.b32.cont [12/16] 0.0, 128
        %624 = vxpose.xlu0.b32.cont [13/16] 0.0, 128
        %625 = vxpose.xlu0.b32.cont [14/16] 0.0, 128
        %626 = vxpose.xlu0.b32.cont [15/16] 0.0, 128
        %627 = vxpose.xlu0.b32.end [16/16] 0.0, 128
        %v628 = vpop.trf.xlu0
        %v629 = vpop.trf.xlu0
        %v630 = vpop.trf.xlu0
        %v631 = vpop.trf.xlu0
        %v632 = vpop.trf.xlu0
        %v633 = vpop.trf.xlu0
        %v634 = vpop.trf.xlu0
        %v635 = vpop.trf.xlu0
        %v636 = vpop.trf.xlu0
        %v637 = vpop.trf.xlu0
        %v638 = vpop.trf.xlu0
        %v639 = vpop.trf.xlu0
        %v640 = vpop.trf.xlu0
        %v641 = vpop.trf.xlu0
        %v642 = vpop.trf.xlu0
        %v643 = vpop.trf.xlu0
        %644 = vxpose.xlu0.b32.start [1/16] %v363, 128
        %645 = vxpose.xlu0.b32.cont [2/16] 0.0, 128
        %646 = vxpose.xlu0.b32.cont [3/16] 0.0, 128
        %647 = vxpose.xlu0.b32.cont [4/16] 0.0, 128
        %648 = vxpose.xlu0.b32.cont [5/16] 0.0, 128
        %649 = vxpose.xlu0.b32.cont [6/16] 0.0, 128
        %650 = vxpose.xlu0.b32.cont [7/16] 0.0, 128
        %651 = vxpose.xlu0.b32.cont [8/16] 0.0, 128
        %652 = vxpose.xlu0.b32.cont [9/16] 0.0, 128
        %653 = vxpose.xlu0.b32.cont [10/16] 0.0, 128
        %654 = vxpose.xlu0.b32.cont [11/16] 0.0, 128
        %655 = vxpose.xlu0.b32.cont [12/16] 0.0, 128
        %656 = vxpose.xlu0.b32.cont [13/16] 0.0, 128
        %657 = vxpose.xlu0.b32.cont [14/16] 0.0, 128
        %658 = vxpose.xlu0.b32.cont [15/16] 0.0, 128
        %659 = vxpose.xlu0.b32.end [16/16] 0.0, 128
        %v660 = vpop.trf.xlu0
        %v661 = vpop.trf.xlu0
        %v662 = vpop.trf.xlu0
        %v663 = vpop.trf.xlu0
        %v664 = vpop.trf.xlu0
        %v665 = vpop.trf.xlu0
        %v666 = vpop.trf.xlu0
        %v667 = vpop.trf.xlu0
        %v668 = vpop.trf.xlu0
        %v669 = vpop.trf.xlu0
        %v670 = vpop.trf.xlu0
        %v671 = vpop.trf.xlu0
        %v672 = vpop.trf.xlu0
        %v673 = vpop.trf.xlu0
        %v674 = vpop.trf.xlu0
        %v675 = vpop.trf.xlu0
        %676 = vxpose.xlu0.b32.start [1/16] %v381, 128
        %677 = vxpose.xlu0.b32.cont [2/16] 0.0, 128
        %678 = vxpose.xlu0.b32.cont [3/16] 0.0, 128
        %679 = vxpose.xlu0.b32.cont [4/16] 0.0, 128
        %680 = vxpose.xlu0.b32.cont [5/16] 0.0, 128
        %681 = vxpose.xlu0.b32.cont [6/16] 0.0, 128
        %682 = vxpose.xlu0.b32.cont [7/16] 0.0, 128
        %683 = vxpose.xlu0.b32.cont [8/16] 0.0, 128
        %684 = vxpose.xlu0.b32.cont [9/16] 0.0, 128
        %685 = vxpose.xlu0.b32.cont [10/16] 0.0, 128
        %686 = vxpose.xlu0.b32.cont [11/16] 0.0, 128
        %687 = vxpose.xlu0.b32.cont [12/16] 0.0, 128
        %688 = vxpose.xlu0.b32.cont [13/16] 0.0, 128
        %689 = vxpose.xlu0.b32.cont [14/16] 0.0, 128
        %690 = vxpose.xlu0.b32.cont [15/16] 0.0, 128
        %691 = vxpose.xlu0.b32.end [16/16] 0.0, 128
        %v692 = vpop.trf.xlu0
        %v693 = vpop.trf.xlu0
        %v694 = vpop.trf.xlu0
        %v695 = vpop.trf.xlu0
        %v696 = vpop.trf.xlu0
        %v697 = vpop.trf.xlu0
        %v698 = vpop.trf.xlu0
        %v699 = vpop.trf.xlu0
        %v700 = vpop.trf.xlu0
        %v701 = vpop.trf.xlu0
        %v702 = vpop.trf.xlu0
        %v703 = vpop.trf.xlu0
        %v704 = vpop.trf.xlu0
        %v705 = vpop.trf.xlu0
        %v706 = vpop.trf.xlu0
        %v707 = vpop.trf.xlu0
        %708 = vxpose.xlu0.b32.start [1/16] %v367, 128
        %709 = vxpose.xlu0.b32.cont [2/16] 0.0, 128
        %710 = vxpose.xlu0.b32.cont [3/16] 0.0, 128
        %711 = vxpose.xlu0.b32.cont [4/16] 0.0, 128
        %712 = vxpose.xlu0.b32.cont [5/16] 0.0, 128
        %713 = vxpose.xlu0.b32.cont [6/16] 0.0, 128
        %714 = vxpose.xlu0.b32.cont [7/16] 0.0, 128
        %715 = vxpose.xlu0.b32.cont [8/16] 0.0, 128
        %716 = vxpose.xlu0.b32.cont [9/16] 0.0, 128
        %717 = vxpose.xlu0.b32.cont [10/16] 0.0, 128
        %718 = vxpose.xlu0.b32.cont [11/16] 0.0, 128
        %719 = vxpose.xlu0.b32.cont [12/16] 0.0, 128
        %720 = vxpose.xlu0.b32.cont [13/16] 0.0, 128
        %721 = vxpose.xlu0.b32.cont [14/16] 0.0, 128
        %722 = vxpose.xlu0.b32.cont [15/16] 0.0, 128
        %723 = vxpose.xlu0.b32.end [16/16] 0.0, 128
        %v724 = vpop.trf.xlu0
        %v725 = vpop.trf.xlu0
        %v726 = vpop.trf.xlu0
        %v727 = vpop.trf.xlu0
        %v728 = vpop.trf.xlu0
        %v729 = vpop.trf.xlu0
        %v730 = vpop.trf.xlu0
        %v731 = vpop.trf.xlu0
        %v732 = vpop.trf.xlu0
        %v733 = vpop.trf.xlu0
        %v734 = vpop.trf.xlu0
        %v735 = vpop.trf.xlu0
        %v736 = vpop.trf.xlu0
        %v737 = vpop.trf.xlu0
        %v738 = vpop.trf.xlu0
        %v739 = vpop.trf.xlu0
        %740 = vxpose.xlu0.b32.start [1/16] %v383, 128
        %741 = vxpose.xlu0.b32.cont [2/16] 0.0, 128
        %742 = vxpose.xlu0.b32.cont [3/16] 0.0, 128
        %743 = vxpose.xlu0.b32.cont [4/16] 0.0, 128
        %744 = vxpose.xlu0.b32.cont [5/16] 0.0, 128
        %745 = vxpose.xlu0.b32.cont [6/16] 0.0, 128
        %746 = vxpose.xlu0.b32.cont [7/16] 0.0, 128
        %747 = vxpose.xlu0.b32.cont [8/16] 0.0, 128
        %748 = vxpose.xlu0.b32.cont [9/16] 0.0, 128
        %749 = vxpose.xlu0.b32.cont [10/16] 0.0, 128
        %750 = vxpose.xlu0.b32.cont [11/16] 0.0, 128
        %751 = vxpose.xlu0.b32.cont [12/16] 0.0, 128
        %752 = vxpose.xlu0.b32.cont [13/16] 0.0, 128
        %753 = vxpose.xlu0.b32.cont [14/16] 0.0, 128
        %754 = vxpose.xlu0.b32.cont [15/16] 0.0, 128
        %755 = vxpose.xlu0.b32.end [16/16] 0.0, 128
        %v756 = vpop.trf.xlu0
        %v757 = vpop.trf.xlu0
        %v758 = vpop.trf.xlu0
        %v759 = vpop.trf.xlu0
        %v760 = vpop.trf.xlu0
        %v761 = vpop.trf.xlu0
        %v762 = vpop.trf.xlu0
        %v763 = vpop.trf.xlu0
        %v764 = vpop.trf.xlu0
        %v765 = vpop.trf.xlu0
        %v766 = vpop.trf.xlu0
        %v767 = vpop.trf.xlu0
        %v768 = vpop.trf.xlu0
        %v769 = vpop.trf.xlu0
        %v770 = vpop.trf.xlu0
        %v771 = vpop.trf.xlu0
        %772 = vxpose.xlu0.b32.start [1/16] %v375, 128
        %773 = vxpose.xlu0.b32.cont [2/16] 0.0, 128
        %774 = vxpose.xlu0.b32.cont [3/16] 0.0, 128
        %775 = vxpose.xlu0.b32.cont [4/16] 0.0, 128
        %776 = vxpose.xlu0.b32.cont [5/16] 0.0, 128
        %777 = vxpose.xlu0.b32.cont [6/16] 0.0, 128
        %778 = vxpose.xlu0.b32.cont [7/16] 0.0, 128
        %779 = vxpose.xlu0.b32.cont [8/16] 0.0, 128
        %780 = vxpose.xlu0.b32.cont [9/16] 0.0, 128
        %781 = vxpose.xlu0.b32.cont [10/16] 0.0, 128
        %782 = vxpose.xlu0.b32.cont [11/16] 0.0, 128
        %783 = vxpose.xlu0.b32.cont [12/16] 0.0, 128
        %784 = vxpose.xlu0.b32.cont [13/16] 0.0, 128
        %785 = vxpose.xlu0.b32.cont [14/16] 0.0, 128
        %786 = vxpose.xlu0.b32.cont [15/16] 0.0, 128
        %787 = vxpose.xlu0.b32.end [16/16] 0.0, 128
        %v788 = vpop.trf.xlu0
        %v789 = vpop.trf.xlu0
        %v790 = vpop.trf.xlu0
        %v791 = vpop.trf.xlu0
        %v792 = vpop.trf.xlu0
        %v793 = vpop.trf.xlu0
        %v794 = vpop.trf.xlu0
        %v795 = vpop.trf.xlu0
        %v796 = vpop.trf.xlu0
        %v797 = vpop.trf.xlu0
        %v798 = vpop.trf.xlu0
        %v799 = vpop.trf.xlu0
        %v800 = vpop.trf.xlu0
        %v801 = vpop.trf.xlu0
        %v802 = vpop.trf.xlu0
        %v803 = vpop.trf.xlu0
        %804 = vxpose.xlu0.b32.start [1/16] %v385, 128
        %805 = vxpose.xlu0.b32.cont [2/16] 0.0, 128
        %806 = vxpose.xlu0.b32.cont [3/16] 0.0, 128
        %807 = vxpose.xlu0.b32.cont [4/16] 0.0, 128
        %808 = vxpose.xlu0.b32.cont [5/16] 0.0, 128
        %809 = vxpose.xlu0.b32.cont [6/16] 0.0, 128
        %810 = vxpose.xlu0.b32.cont [7/16] 0.0, 128
        %811 = vxpose.xlu0.b32.cont [8/16] 0.0, 128
        %812 = vxpose.xlu0.b32.cont [9/16] 0.0, 128
        %813 = vxpose.xlu0.b32.cont [10/16] 0.0, 128
        %814 = vxpose.xlu0.b32.cont [11/16] 0.0, 128
        %815 = vxpose.xlu0.b32.cont [12/16] 0.0, 128
        %816 = vxpose.xlu0.b32.cont [13/16] 0.0, 128
        %817 = vxpose.xlu0.b32.cont [14/16] 0.0, 128
        %818 = vxpose.xlu0.b32.cont [15/16] 0.0, 128
        %819 = vxpose.xlu0.b32.end [16/16] 0.0, 128
        %v820 = vpop.trf.xlu0
        %v821 = vpop.trf.xlu0
        %v822 = vpop.trf.xlu0
        %v823 = vpop.trf.xlu0
        %v824 = vpop.trf.xlu0
        %v825 = vpop.trf.xlu0
        %v826 = vpop.trf.xlu0
        %v827 = vpop.trf.xlu0
        %v828 = vpop.trf.xlu0
        %v829 = vpop.trf.xlu0
        %v830 = vpop.trf.xlu0
        %v831 = vpop.trf.xlu0
        %v832 = vpop.trf.xlu0
        %v833 = vpop.trf.xlu0
        %v834 = vpop.trf.xlu0
        %v835 = vpop.trf.xlu0
        %836 = vxpose.xlu0.b32.start [1/16] %v379, 128
        %837 = vxpose.xlu0.b32.cont [2/16] 0.0, 128
        %838 = vxpose.xlu0.b32.cont [3/16] 0.0, 128
        %839 = vxpose.xlu0.b32.cont [4/16] 0.0, 128
        %840 = vxpose.xlu0.b32.cont [5/16] 0.0, 128
        %841 = vxpose.xlu0.b32.cont [6/16] 0.0, 128
        %842 = vxpose.xlu0.b32.cont [7/16] 0.0, 128
        %843 = vxpose.xlu0.b32.cont [8/16] 0.0, 128
        %844 = vxpose.xlu0.b32.cont [9/16] 0.0, 128
        %845 = vxpose.xlu0.b32.cont [10/16] 0.0, 128
        %846 = vxpose.xlu0.b32.cont [11/16] 0.0, 128
        %847 = vxpose.xlu0.b32.cont [12/16] 0.0, 128
        %848 = vxpose.xlu0.b32.cont [13/16] 0.0, 128
        %849 = vxpose.xlu0.b32.cont [14/16] 0.0, 128
        %850 = vxpose.xlu0.b32.cont [15/16] 0.0, 128
        %851 = vxpose.xlu0.b32.end [16/16] 0.0, 128
        %v852 = vpop.trf.xlu0
        %v853 = vpop.trf.xlu0
        %v854 = vpop.trf.xlu0
        %v855 = vpop.trf.xlu0
        %v856 = vpop.trf.xlu0
        %v857 = vpop.trf.xlu0
        %v858 = vpop.trf.xlu0
        %v859 = vpop.trf.xlu0
        %v860 = vpop.trf.xlu0
        %v861 = vpop.trf.xlu0
        %v862 = vpop.trf.xlu0
        %v863 = vpop.trf.xlu0
        %v864 = vpop.trf.xlu0
        %v865 = vpop.trf.xlu0
        %v866 = vpop.trf.xlu0
        %v867 = vpop.trf.xlu0
        %868 = vxpose.xlu0.b32.start [1/16] %v387, 128
        %869 = vxpose.xlu0.b32.cont [2/16] 0.0, 128
        %870 = vxpose.xlu0.b32.cont [3/16] 0.0, 128
        %871 = vxpose.xlu0.b32.cont [4/16] 0.0, 128
        %872 = vxpose.xlu0.b32.cont [5/16] 0.0, 128
        %873 = vxpose.xlu0.b32.cont [6/16] 0.0, 128
        %874 = vxpose.xlu0.b32.cont [7/16] 0.0, 128
        %875 = vxpose.xlu0.b32.cont [8/16] 0.0, 128
        %876 = vxpose.xlu0.b32.cont [9/16] 0.0, 128
        %877 = vxpose.xlu0.b32.cont [10/16] 0.0, 128
        %878 = vxpose.xlu0.b32.cont [11/16] 0.0, 128
        %879 = vxpose.xlu0.b32.cont [12/16] 0.0, 128
        %880 = vxpose.xlu0.b32.cont [13/16] 0.0, 128
        %881 = vxpose.xlu0.b32.cont [14/16] 0.0, 128
        %882 = vxpose.xlu0.b32.cont [15/16] 0.0, 128
        %883 = vxpose.xlu0.b32.end [16/16] 0.0, 128
        %v884 = vpop.trf.xlu0
        %v885 = vpop.trf.xlu0
        %v886 = vpop.trf.xlu0
        %v887 = vpop.trf.xlu0
        %v888 = vpop.trf.xlu0
        %v889 = vpop.trf.xlu0
        %v890 = vpop.trf.xlu0
        %v891 = vpop.trf.xlu0
        %v892 = vpop.trf.xlu0
        %v893 = vpop.trf.xlu0
        %v894 = vpop.trf.xlu0
        %v895 = vpop.trf.xlu0
        %v896 = vpop.trf.xlu0
        %v897 = vpop.trf.xlu0
        %v898 = vpop.trf.xlu0
        %v899 = vpop.trf.xlu0
        %v900 = vrot.slane %v468, 4
        %v901 = vsel %vm276, %v900, %v404
        %v902 = vrot.slane %v404, 4
        %v903 = vsel %vm276, %v468, %v902
        %v905 = vunpack.c.l.s4 1983009808
        %v906 = vunpack.c.0.s8 %v905
        %v907 = vperm.slane %v901, %v906
        %v909 = vunpack.c.l.s4 1983009808
        %v910 = vunpack.c.0.s8 %v909
        %v911 = vperm.slane %v903, %v910
        %v912 = vrot.slane %v500, 4
        %v913 = vsel %vm276, %v912, %v436
        %v914 = vrot.slane %v436, 4
        %v915 = vsel %vm276, %v500, %v914
        %v917 = vunpack.c.l.s4 1983009808
        %v918 = vunpack.c.0.s8 %v917
        %v919 = vperm.slane %v913, %v918
        %v921 = vunpack.c.l.s4 1983009808
        %v922 = vunpack.c.0.s8 %v921
        %v923 = vperm.slane %v915, %v922
        %v924 = vrot.slane %v596, 4
        %v925 = vsel %vm276, %v924, %v532
        %v926 = vrot.slane %v532, 4
        %v927 = vsel %vm276, %v596, %v926
        %v929 = vunpack.c.l.s4 1983009808
        %v930 = vunpack.c.0.s8 %v929
        %v931 = vperm.slane %v925, %v930
        %v933 = vunpack.c.l.s4 1983009808
        %v934 = vunpack.c.0.s8 %v933
        %v935 = vperm.slane %v927, %v934
        %v936 = vrot.slane %v628, 4
        %v937 = vsel %vm276, %v936, %v564
        %v938 = vrot.slane %v564, 4
        %v939 = vsel %vm276, %v628, %v938
        %v941 = vunpack.c.l.s4 1983009808
        %v942 = vunpack.c.0.s8 %v941
        %v943 = vperm.slane %v937, %v942
        %v945 = vunpack.c.l.s4 1983009808
        %v946 = vunpack.c.0.s8 %v945
        %v947 = vperm.slane %v939, %v946
        %v948 = vrot.slane %v919, 4
        %v949 = vsel %vm276, %v948, %v907
        %v950 = vrot.slane %v907, 4
        %v951 = vsel %vm276, %v919, %v950
        %v953 = vunpack.c.l.s4 1934713408
        %v954 = vunpack.c.0.s8 %v953
        %v955 = vperm.slane %v949, %v954
        %v957 = vunpack.c.l.s4 1934713408
        %v958 = vunpack.c.0.s8 %v957
        %v959 = vperm.slane %v951, %v958
        %v960 = vrot.slane %v923, 4
        %v961 = vsel %vm276, %v960, %v911
        %v962 = vrot.slane %v911, 4
        %v963 = vsel %vm276, %v923, %v962
        %v965 = vunpack.c.l.s4 1934713408
        %v966 = vunpack.c.0.s8 %v965
        %v967 = vperm.slane %v961, %v966
        %v969 = vunpack.c.l.s4 1934713408
        %v970 = vunpack.c.0.s8 %v969
        %v971 = vperm.slane %v963, %v970
        %v972 = vrot.slane %v943, 4
        %v973 = vsel %vm276, %v972, %v931
        %v974 = vrot.slane %v931, 4
        %v975 = vsel %vm276, %v943, %v974
        %v977 = vunpack.c.l.s4 1934713408
        %v978 = vunpack.c.0.s8 %v977
        %v979 = vperm.slane %v973, %v978
        %v981 = vunpack.c.l.s4 1934713408
        %v982 = vunpack.c.0.s8 %v981
        %v983 = vperm.slane %v975, %v982
        %v984 = vrot.slane %v947, 4
        %v985 = vsel %vm276, %v984, %v935
        %v986 = vrot.slane %v935, 4
        %v987 = vsel %vm276, %v947, %v986
        %v989 = vunpack.c.l.s4 1934713408
        %v990 = vunpack.c.0.s8 %v989
        %v991 = vperm.slane %v985, %v990
        %v993 = vunpack.c.l.s4 1934713408
        %v994 = vunpack.c.0.s8 %v993
        %v995 = vperm.slane %v987, %v994
        %v996 = vrot.slane %v979, 4
        %v997 = vsel %vm276, %v996, %v955
        %v998 = vrot.slane %v955, 4
        %v999 = vsel %vm276, %v979, %v998
        %v1000 = vrot.slane %v983, 4
        %v1001 = vsel %vm276, %v1000, %v959
        %v1002 = vrot.slane %v959, 4
        %v1003 = vsel %vm276, %v983, %v1002
        %v1004 = vrot.slane %v991, 4
        %v1005 = vsel %vm276, %v1004, %v967
        %v1006 = vrot.slane %v967, 4
        %v1007 = vsel %vm276, %v991, %v1006
        %v1008 = vrot.slane %v995, 4
        %v1009 = vsel %vm276, %v1008, %v971
        %v1010 = vrot.slane %v971, 4
        %v1011 = vsel %vm276, %v995, %v1010
        %v1012 = vrot.slane %v724, 4
        %v1013 = vsel %vm276, %v1012, %v660
        %v1014 = vrot.slane %v660, 4
        %v1015 = vsel %vm276, %v724, %v1014
        %v1017 = vunpack.c.l.s4 1983009808
        %v1018 = vunpack.c.0.s8 %v1017
        %v1019 = vperm.slane %v1013, %v1018
        %v1021 = vunpack.c.l.s4 1983009808
        %v1022 = vunpack.c.0.s8 %v1021
        %v1023 = vperm.slane %v1015, %v1022
        %v1024 = vrot.slane %v756, 4
        %v1025 = vsel %vm276, %v1024, %v692
        %v1026 = vrot.slane %v692, 4
        %v1027 = vsel %vm276, %v756, %v1026
        %v1029 = vunpack.c.l.s4 1983009808
        %v1030 = vunpack.c.0.s8 %v1029
        %v1031 = vperm.slane %v1025, %v1030
        %v1033 = vunpack.c.l.s4 1983009808
        %v1034 = vunpack.c.0.s8 %v1033
        %v1035 = vperm.slane %v1027, %v1034
        %v1036 = vrot.slane %v852, 4
        %v1037 = vsel %vm276, %v1036, %v788
        %v1038 = vrot.slane %v788, 4
        %v1039 = vsel %vm276, %v852, %v1038
        %v1041 = vunpack.c.l.s4 1983009808
        %v1042 = vunpack.c.0.s8 %v1041
        %v1043 = vperm.slane %v1037, %v1042
        %v1045 = vunpack.c.l.s4 1983009808
        %v1046 = vunpack.c.0.s8 %v1045
        %v1047 = vperm.slane %v1039, %v1046
        %v1048 = vrot.slane %v884, 4
        %v1049 = vsel %vm276, %v1048, %v820
        %v1050 = vrot.slane %v820, 4
        %v1051 = vsel %vm276, %v884, %v1050
        %v1053 = vunpack.c.l.s4 1983009808
        %v1054 = vunpack.c.0.s8 %v1053
        %v1055 = vperm.slane %v1049, %v1054
        %v1057 = vunpack.c.l.s4 1983009808
        %v1058 = vunpack.c.0.s8 %v1057
        %v1059 = vperm.slane %v1051, %v1058
        %v1060 = vrot.slane %v1031, 4
        %v1061 = vsel %vm276, %v1060, %v1019
        %v1062 = vrot.slane %v1019, 4
        %v1063 = vsel %vm276, %v1031, %v1062
        %v1065 = vunpack.c.l.s4 1934713408
        %v1066 = vunpack.c.0.s8 %v1065
        %v1067 = vperm.slane %v1061, %v1066
        %v1069 = vunpack.c.l.s4 1934713408
        %v1070 = vunpack.c.0.s8 %v1069
        %v1071 = vperm.slane %v1063, %v1070
        %v1072 = vrot.slane %v1035, 4
        %v1073 = vsel %vm276, %v1072, %v1023
        %v1074 = vrot.slane %v1023, 4
        %v1075 = vsel %vm276, %v1035, %v1074
        %v1077 = vunpack.c.l.s4 1934713408
        %v1078 = vunpack.c.0.s8 %v1077
        %v1079 = vperm.slane %v1073, %v1078
        %v1081 = vunpack.c.l.s4 1934713408
        %v1082 = vunpack.c.0.s8 %v1081
        %v1083 = vperm.slane %v1075, %v1082
        %v1084 = vrot.slane %v1055, 4
        %v1085 = vsel %vm276, %v1084, %v1043
        %v1086 = vrot.slane %v1043, 4
        %v1087 = vsel %vm276, %v1055, %v1086
        %v1089 = vunpack.c.l.s4 1934713408
        %v1090 = vunpack.c.0.s8 %v1089
        %v1091 = vperm.slane %v1085, %v1090
        %v1093 = vunpack.c.l.s4 1934713408
        %v1094 = vunpack.c.0.s8 %v1093
        %v1095 = vperm.slane %v1087, %v1094
        %v1096 = vrot.slane %v1059, 4
        %v1097 = vsel %vm276, %v1096, %v1047
        %v1098 = vrot.slane %v1047, 4
        %v1099 = vsel %vm276, %v1059, %v1098
        %v1101 = vunpack.c.l.s4 1934713408
        %v1102 = vunpack.c.0.s8 %v1101
        %v1103 = vperm.slane %v1097, %v1102
        %v1105 = vunpack.c.l.s4 1934713408
        %v1106 = vunpack.c.0.s8 %v1105
        %v1107 = vperm.slane %v1099, %v1106
        %v1108 = vrot.slane %v1091, 4
        %v1109 = vsel %vm276, %v1108, %v1067
        %v1110 = vrot.slane %v1067, 4
        %v1111 = vsel %vm276, %v1091, %v1110
        %v1112 = vrot.slane %v1095, 4
        %v1113 = vsel %vm276, %v1112, %v1071
        %v1114 = vrot.slane %v1071, 4
        %v1115 = vsel %vm276, %v1095, %v1114
        %v1116 = vrot.slane %v1103, 4
        %v1117 = vsel %vm276, %v1116, %v1079
        %v1118 = vrot.slane %v1079, 4
        %v1119 = vsel %vm276, %v1103, %v1118
        %v1120 = vrot.slane %v1107, 4
        %v1121 = vsel %vm276, %v1120, %v1083
        %v1122 = vrot.slane %v1083, 4
        %v1123 = vsel %vm276, %v1107, %v1122
        %v1124 = vrot.slane %v469, 4
        %v1125 = vsel %vm276, %v1124, %v405
        %v1126 = vrot.slane %v405, 4
        %v1127 = vsel %vm276, %v469, %v1126
        %v1129 = vunpack.c.l.s4 1983009808
        %v1130 = vunpack.c.0.s8 %v1129
        %v1131 = vperm.slane %v1125, %v1130
        %v1133 = vunpack.c.l.s4 1983009808
        %v1134 = vunpack.c.0.s8 %v1133
        %v1135 = vperm.slane %v1127, %v1134
        %v1136 = vrot.slane %v501, 4
        %v1137 = vsel %vm276, %v1136, %v437
        %v1138 = vrot.slane %v437, 4
        %v1139 = vsel %vm276, %v501, %v1138
        %v1141 = vunpack.c.l.s4 1983009808
        %v1142 = vunpack.c.0.s8 %v1141
        %v1143 = vperm.slane %v1137, %v1142
        %v1145 = vunpack.c.l.s4 1983009808
        %v1146 = vunpack.c.0.s8 %v1145
        %v1147 = vperm.slane %v1139, %v1146
        %v1148 = vrot.slane %v597, 4
        %v1149 = vsel %vm276, %v1148, %v533
        %v1150 = vrot.slane %v533, 4
        %v1151 = vsel %vm276, %v597, %v1150
        %v1153 = vunpack.c.l.s4 1983009808
        %v1154 = vunpack.c.0.s8 %v1153
        %v1155 = vperm.slane %v1149, %v1154
        %v1157 = vunpack.c.l.s4 1983009808
        %v1158 = vunpack.c.0.s8 %v1157
        %v1159 = vperm.slane %v1151, %v1158
        %v1160 = vrot.slane %v629, 4
        %v1161 = vsel %vm276, %v1160, %v565
        %v1162 = vrot.slane %v565, 4
        %v1163 = vsel %vm276, %v629, %v1162
        %v1165 = vunpack.c.l.s4 1983009808
        %v1166 = vunpack.c.0.s8 %v1165
        %v1167 = vperm.slane %v1161, %v1166
        %v1169 = vunpack.c.l.s4 1983009808
        %v1170 = vunpack.c.0.s8 %v1169
        %v1171 = vperm.slane %v1163, %v1170
        %v1172 = vrot.slane %v1143, 4
        %v1173 = vsel %vm276, %v1172, %v1131
        %v1174 = vrot.slane %v1131, 4
        %v1175 = vsel %vm276, %v1143, %v1174
        %v1177 = vunpack.c.l.s4 1934713408
        %v1178 = vunpack.c.0.s8 %v1177
        %v1179 = vperm.slane %v1173, %v1178
        %v1181 = vunpack.c.l.s4 1934713408
        %v1182 = vunpack.c.0.s8 %v1181
        %v1183 = vperm.slane %v1175, %v1182
        %v1184 = vrot.slane %v1147, 4
        %v1185 = vsel %vm276, %v1184, %v1135
        %v1186 = vrot.slane %v1135, 4
        %v1187 = vsel %vm276, %v1147, %v1186
        %v1189 = vunpack.c.l.s4 1934713408
        %v1190 = vunpack.c.0.s8 %v1189
        %v1191 = vperm.slane %v1185, %v1190
        %v1193 = vunpack.c.l.s4 1934713408
        %v1194 = vunpack.c.0.s8 %v1193
        %v1195 = vperm.slane %v1187, %v1194
        %v1196 = vrot.slane %v1167, 4
        %v1197 = vsel %vm276, %v1196, %v1155
        %v1198 = vrot.slane %v1155, 4
        %v1199 = vsel %vm276, %v1167, %v1198
        %v1201 = vunpack.c.l.s4 1934713408
        %v1202 = vunpack.c.0.s8 %v1201
        %v1203 = vperm.slane %v1197, %v1202
        %v1205 = vunpack.c.l.s4 1934713408
        %v1206 = vunpack.c.0.s8 %v1205
        %v1207 = vperm.slane %v1199, %v1206
        %v1208 = vrot.slane %v1171, 4
        %v1209 = vsel %vm276, %v1208, %v1159
        %v1210 = vrot.slane %v1159, 4
        %v1211 = vsel %vm276, %v1171, %v1210
        %v1213 = vunpack.c.l.s4 1934713408
        %v1214 = vunpack.c.0.s8 %v1213
        %v1215 = vperm.slane %v1209, %v1214
        %v1217 = vunpack.c.l.s4 1934713408
        %v1218 = vunpack.c.0.s8 %v1217
        %v1219 = vperm.slane %v1211, %v1218
        %v1220 = vrot.slane %v1203, 4
        %v1221 = vsel %vm276, %v1220, %v1179
        %v1222 = vrot.slane %v1179, 4
        %v1223 = vsel %vm276, %v1203, %v1222
        %v1224 = vrot.slane %v1207, 4
        %v1225 = vsel %vm276, %v1224, %v1183
        %v1226 = vrot.slane %v1183, 4
        %v1227 = vsel %vm276, %v1207, %v1226
        %v1228 = vrot.slane %v1215, 4
        %v1229 = vsel %vm276, %v1228, %v1191
        %v1230 = vrot.slane %v1191, 4
        %v1231 = vsel %vm276, %v1215, %v1230
        %v1232 = vrot.slane %v1219, 4
        %v1233 = vsel %vm276, %v1232, %v1195
        %v1234 = vrot.slane %v1195, 4
        %v1235 = vsel %vm276, %v1219, %v1234
        %v1236 = vrot.slane %v725, 4
        %v1237 = vsel %vm276, %v1236, %v661
        %v1238 = vrot.slane %v661, 4
        %v1239 = vsel %vm276, %v725, %v1238
        %v1241 = vunpack.c.l.s4 1983009808
        %v1242 = vunpack.c.0.s8 %v1241
        %v1243 = vperm.slane %v1237, %v1242
        %v1245 = vunpack.c.l.s4 1983009808
        %v1246 = vunpack.c.0.s8 %v1245
        %v1247 = vperm.slane %v1239, %v1246
        %v1248 = vrot.slane %v757, 4
        %v1249 = vsel %vm276, %v1248, %v693
        %v1250 = vrot.slane %v693, 4
        %v1251 = vsel %vm276, %v757, %v1250
        %v1253 = vunpack.c.l.s4 1983009808
        %v1254 = vunpack.c.0.s8 %v1253
        %v1255 = vperm.slane %v1249, %v1254
        %v1257 = vunpack.c.l.s4 1983009808
        %v1258 = vunpack.c.0.s8 %v1257
        %v1259 = vperm.slane %v1251, %v1258
        %v1260 = vrot.slane %v853, 4
        %v1261 = vsel %vm276, %v1260, %v789
        %v1262 = vrot.slane %v789, 4
        %v1263 = vsel %vm276, %v853, %v1262
        %v1265 = vunpack.c.l.s4 1983009808
        %v1266 = vunpack.c.0.s8 %v1265
        %v1267 = vperm.slane %v1261, %v1266
        %v1269 = vunpack.c.l.s4 1983009808
        %v1270 = vunpack.c.0.s8 %v1269
        %v1271 = vperm.slane %v1263, %v1270
        %v1272 = vrot.slane %v885, 4
        %v1273 = vsel %vm276, %v1272, %v821
        %v1274 = vrot.slane %v821, 4
        %v1275 = vsel %vm276, %v885, %v1274
        %v1277 = vunpack.c.l.s4 1983009808
        %v1278 = vunpack.c.0.s8 %v1277
        %v1279 = vperm.slane %v1273, %v1278
        %v1281 = vunpack.c.l.s4 1983009808
        %v1282 = vunpack.c.0.s8 %v1281
        %v1283 = vperm.slane %v1275, %v1282
        %v1284 = vrot.slane %v1255, 4
        %v1285 = vsel %vm276, %v1284, %v1243
        %v1286 = vrot.slane %v1243, 4
        %v1287 = vsel %vm276, %v1255, %v1286
        %v1289 = vunpack.c.l.s4 1934713408
        %v1290 = vunpack.c.0.s8 %v1289
        %v1291 = vperm.slane %v1285, %v1290
        %v1293 = vunpack.c.l.s4 1934713408
        %v1294 = vunpack.c.0.s8 %v1293
        %v1295 = vperm.slane %v1287, %v1294
        %v1296 = vrot.slane %v1259, 4
        %v1297 = vsel %vm276, %v1296, %v1247
        %v1298 = vrot.slane %v1247, 4
        %v1299 = vsel %vm276, %v1259, %v1298
        %v1301 = vunpack.c.l.s4 1934713408
        %v1302 = vunpack.c.0.s8 %v1301
        %v1303 = vperm.slane %v1297, %v1302
        %v1305 = vunpack.c.l.s4 1934713408
        %v1306 = vunpack.c.0.s8 %v1305
        %v1307 = vperm.slane %v1299, %v1306
        %v1308 = vrot.slane %v1279, 4
        %v1309 = vsel %vm276, %v1308, %v1267
        %v1310 = vrot.slane %v1267, 4
        %v1311 = vsel %vm276, %v1279, %v1310
        %v1313 = vunpack.c.l.s4 1934713408
        %v1314 = vunpack.c.0.s8 %v1313
        %v1315 = vperm.slane %v1309, %v1314
        %v1317 = vunpack.c.l.s4 1934713408
        %v1318 = vunpack.c.0.s8 %v1317
        %v1319 = vperm.slane %v1311, %v1318
        %v1320 = vrot.slane %v1283, 4
        %v1321 = vsel %vm276, %v1320, %v1271
        %v1322 = vrot.slane %v1271, 4
        %v1323 = vsel %vm276, %v1283, %v1322
        %v1325 = vunpack.c.l.s4 1934713408
        %v1326 = vunpack.c.0.s8 %v1325
        %v1327 = vperm.slane %v1321, %v1326
        %v1329 = vunpack.c.l.s4 1934713408
        %v1330 = vunpack.c.0.s8 %v1329
        %v1331 = vperm.slane %v1323, %v1330
        %v1332 = vrot.slane %v1315, 4
        %v1333 = vsel %vm276, %v1332, %v1291
        %v1334 = vrot.slane %v1291, 4
        %v1335 = vsel %vm276, %v1315, %v1334
        %v1336 = vrot.slane %v1319, 4
        %v1337 = vsel %vm276, %v1336, %v1295
        %v1338 = vrot.slane %v1295, 4
        %v1339 = vsel %vm276, %v1319, %v1338
        %v1340 = vrot.slane %v1327, 4
        %v1341 = vsel %vm276, %v1340, %v1303
        %v1342 = vrot.slane %v1303, 4
        %v1343 = vsel %vm276, %v1327, %v1342
        %v1344 = vrot.slane %v1331, 4
        %v1345 = vsel %vm276, %v1344, %v1307
        %v1346 = vrot.slane %v1307, 4
        %v1347 = vsel %vm276, %v1331, %v1346
        %vm1348 = vcmask 31744
        %1349 = vst.msk [vmem:[%s138] sm:$0xff] %vm1348, %v997
        %1350 = vst.msk [vmem:[%s138 + $0x8] sm:$0xff] %vm1348, %v1109
        %1351 = vst.msk [vmem:[%s138 + $0x10] sm:$0xff] %vm1348, %v999
        %1352 = vst.msk [vmem:[%s138 + $0x18] sm:$0xff] %vm1348, %v1111
        %1353 = vst.msk [vmem:[%s138 + $0x20] sm:$0xff] %vm1348, %v1001
        %1354 = vst.msk [vmem:[%s138 + $0x28] sm:$0xff] %vm1348, %v1113
        %1355 = vst.msk [vmem:[%s138 + $0x30] sm:$0xff] %vm1348, %v1003
        %1356 = vst.msk [vmem:[%s138 + $0x38] sm:$0xff] %vm1348, %v1115
        %1357 = vst.msk [vmem:[%s138 + $0x40] sm:$0xff] %vm1348, %v1005
        %1358 = vst.msk [vmem:[%s138 + $0x48] sm:$0xff] %vm1348, %v1117
        %1359 = vst.msk [vmem:[%s138 + $0x50] sm:$0xff] %vm1348, %v1007
        %1360 = vst.msk [vmem:[%s138 + $0x58] sm:$0xff] %vm1348, %v1119
        %1361 = vst.msk [vmem:[%s138 + $0x60] sm:$0xff] %vm1348, %v1009
        %1362 = vst.msk [vmem:[%s138 + $0x68] sm:$0xff] %vm1348, %v1121
        %1363 = vst.msk [vmem:[%s138 + $0x70] sm:$0xff] %vm1348, %v1011
        %1364 = vst.msk [vmem:[%s138 + $0x78] sm:$0xff] %vm1348, %v1123
        %1365 = vst.msk [vmem:[%s138 + $0x80] sm:$0xff] %vm1348, %v1221
        %1366 = vst.msk [vmem:[%s138 + $0x88] sm:$0xff] %vm1348, %v1333
        %1367 = vst.msk [vmem:[%s138 + $0x90] sm:$0xff] %vm1348, %v1223
        %1368 = vst.msk [vmem:[%s138 + $0x98] sm:$0xff] %vm1348, %v1335
        %1369 = vst.msk [vmem:[%s138 + $0xa0] sm:$0xff] %vm1348, %v1225
        %1370 = vst.msk [vmem:[%s138 + $0xa8] sm:$0xff] %vm1348, %v1337
        %1371 = vst.msk [vmem:[%s138 + $0xb0] sm:$0xff] %vm1348, %v1227
        %1372 = vst.msk [vmem:[%s138 + $0xb8] sm:$0xff] %vm1348, %v1339
        %1373 = vst.msk [vmem:[%s138 + $0xc0] sm:$0xff] %vm1348, %v1229
        %1374 = vst.msk [vmem:[%s138 + $0xc8] sm:$0xff] %vm1348, %v1341
        %1375 = vst.msk [vmem:[%s138 + $0xd0] sm:$0xff] %vm1348, %v1231
        %1376 = vst.msk [vmem:[%s138 + $0xd8] sm:$0xff] %vm1348, %v1343
        %1377 = vst.msk [vmem:[%s138 + $0xe0] sm:$0xff] %vm1348, %v1233
        %1378 = vst.msk [vmem:[%s138 + $0xe8] sm:$0xff] %vm1348, %v1345
        %1379 = vst.msk [vmem:[%s138 + $0xf0] sm:$0xff] %vm1348, %v1235
        %1380 = vst.msk [vmem:[%s138 + $0xf8] sm:$0xff] %vm1348, %v1347
        %p1381 = scmp.lt.s32.totalorder %s15, 1
        %s1382 = scalar_select %p1381, %s15, 1
        %s1383 = smul.addr %s1382, 32
        %s1384 = smul.addr %s1383, 8
        %s1385 = scalar_lea.vmem %s1, %s1384
        // Predicated region
        $region29: #{tpu_custom_call.1} parent=23 // pred_check
          %p1386 = pneg %p59
        $region30: #{tpu_custom_call.1} parent=23 // pred_check_branch
          %1388 = sbr.rel (%p1386) target = $region32
        $region31: #{tpu_custom_call.1} parent=23 // pred_region
          _
        $region32: #{tpu_custom_call.1} parent=23 // pred_fallthru
          _
      $region24: #{tpu_custom_call.1} parent=5 // pred_fallthru
        _
      %p1389 = scmp.le.s32.totalorder 2, %s10
      // Predicated region
      $region33: #{tpu_custom_call.1} parent=5 // pred_check
        %p1390 = pneg %p1389
      $region34: #{tpu_custom_call.1} parent=5 // pred_check_branch
        %1392 = sbr.rel (%p1390) target = $region36
      $region35: #{tpu_custom_call.1} parent=5 // pred_region
        %s1393 = ssub.s32 %s10, 2
        // Predicated region
        $region37: #{tpu_custom_call.1} parent=35 // pred_check
          %p1394 = pneg %p65
        $region38: #{tpu_custom_call.1} parent=35 // pred_check_branch
          %1396 = sbr.rel (%p1394) target = $region40
        $region39: #{tpu_custom_call.1} parent=35 // pred_region
          %p1397 = scmp.lt.s32.totalorder %s16, 1
          %s1398 = scalar_select %p1397, %s16, 1
          %s1399 = smul.addr %s1398, 32
          %s1400 = smul.addr %s1399, 8
          %s1401 = scalar_lea.vmem %s1, %s1400
        $region40: #{tpu_custom_call.1} parent=35 // pred_fallthru
          _
      $region36: #{tpu_custom_call.1} parent=5 // pred_fallthru
        _
    $region6: #{tpu_custom_call.1} parent=1 // loop_footer
      %s14 = sadd.s32 1, %s10
    $region7: #{tpu_custom_call.1} parent=1 // loop_footer_branch
      %9 = sbr.rel target = $region3
    $region8: #{tpu_custom_call.1} parent=1 // loop_exit
      _
    %1402 = vsyncpa [#allocation3], 1
    %s1403 = scalar_lea.sflag [#allocation3], 1
    %1404 = vsyncpa %s1403, 1

</llo_original>
